<compile_context>
chip_gen: v6e
topology: v6e:2x2x1
jax: 0.10.0
libtpu: 0.0.40
codegen_flags: <defaults>
</compile_context>

<pallas_src>
import functools

import jax
import jax.numpy as jnp
from jax.experimental import pallas as pl
from jax.experimental.pallas import tpu as pltpu


SEQ_ALIGN = 128          # pad seq len to a lane-dense multiple of 128


def _round_up(x, m):
    return (x + m - 1) // m * m


def _vmem_limit_bytes():
    # Size the scoped-VMEM budget from the actual chip (v5e/v6e: 128 MiB physical,
    # v7x: 64 MiB).  Fall back to the previously-validated 48 MB if the query fails.
    try:
        cap = int(pltpu.get_tpu_info().vmem_capacity_bytes)
        return min(int(cap * 0.85), 110 * 1024 * 1024)
    except Exception:
        return 48 * 1024 * 1024


# ---------------------------------------------------------------------------
# in-kernel math helpers (statistics stay f32)
# ---------------------------------------------------------------------------
def _gelu(x):
    # tanh-form GELU: transcendental on the EUP slot. ~1e-3 vs exact erf GELU.
    c = 0.7978845608028654  # sqrt(2/pi)
    return 0.5 * x * (1.0 + jnp.tanh(c * (x + 0.044715 * (x * x * x))))


def _layernorm(x, w, b, eps=1e-5):
    # x: (N, D) f32, w/b: (1, D); matches torch.nn.LayerNorm(dim) (biased variance)
    mu = jnp.mean(x, axis=-1, keepdims=True)
    xc = x - mu
    var = jnp.mean(xc * xc, axis=-1, keepdims=True)
    return xc * jax.lax.rsqrt(var + eps) * w + b


# ---------------------------------------------------------------------------
# Pallas kernels
# ---------------------------------------------------------------------------
def patch_embed_kernel(p_ref, w_ref, b_ref, o_ref):
    # (TM, C*p*p)bf16 @ (C*p*p, D)bf16 -> f32, == Conv2d(k=stride=p) + flatten + bias
    o_ref[...] = (
        jnp.dot(p_ref[...], w_ref[...], preferred_element_type=jnp.float32)
        + b_ref[...]
    ).astype(o_ref.dtype)


def vit_blocks_kernel(
    tok_ref, prefix_ref,
    ln1w_ref, ln1b_ref,
    qkvw_ref,
    projw_ref, projb_ref,
    ln2w_ref, ln2b_ref,
    fc1w_ref, fc1b_ref,
    fc2w_ref, fc2b_ref,
    normw_ref, normb_ref,
    o_ref,
    act_ref, heads_ref,
    *, num_heads, nattr, n_valid,
):
    """One (batch-block, layer) grid step of the fused transformer stack.

    grid = (B // TB, depth).  `act_ref` holds the (TB*Npad, D) f32 activations and
    is carried across the depth axis; per-layer weight DMA (qkv/proj/fc1/fc2) is
    pipelined over depth and amortised over the TB images in the block.
    The final LayerNorm is applied on the last depth step before the only HBM store.
    """
    layer = pl.program_id(1)
    depth = pl.num_programs(1)
    bf16 = jnp.bfloat16

    TB, Npad, D = o_ref.shape
    Np = tok_ref.shape[1]
    hd = D // num_heads

    # ---- layer 0: assemble [cls+pos | patches+pos | zero padding] in VMEM --------
    @pl.when(layer == 0)
    def _assemble_tokens():
        for tb in range(TB):                      # static unroll over the batch block
            base = tb * Npad
            # prefix = [cls + pos[:nattr] ; pos[nattr:N] ; zeros]  (Npad, D) f32
            act_ref[pl.ds(base, Npad), :] = prefix_ref[...]
            cur = act_ref[pl.ds(base + nattr, Np), :]
            act_ref[pl.ds(base + nattr, Np), :] = cur + tok_ref[tb].astype(jnp.float32)

    # static additive key mask for the padded tail of the sequence (scores are f32,
    # so -1e30 is safe; if scores ever move to bf16 this must shrink to ~-3e4).
    if n_valid < Npad:
        kmask = jnp.where(
            jax.lax.broadcasted_iota(jnp.int32, (1, Npad), 1) < n_valid,
            0.0, -1e30,
        ).astype(jnp.float32)
    else:
        kmask = None

    # ---- attention branch: x + proj(MHSA(LN1(x))) ---------------------------------
    h = _layernorm(act_ref[...], ln1w_ref[0], ln1b_ref[0])          # (TB*Npad, D) f32
    # single downcast to bf16 after the f32-accum dot (double rounding is harmless);
    # the softmax scale is already folded into the Q columns of qkv_w.
    qkv = jnp.dot(h.astype(bf16), qkvw_ref[0],
                  preferred_element_type=jnp.float32).astype(bf16)  # (TB*Npad, 3D) bf16

    pw = projw_ref[0]                                               # (D, D) bf16
    for tb in range(TB):                                            # static unroll
        r0 = tb * Npad
        q_im = qkv[r0:r0 + Npad, 0 * D:1 * D]                       # (Npad, D) bf16
        k_im = qkv[r0:r0 + Npad, 1 * D:2 * D]
        v_im = qkv[r0:r0 + Npad, 2 * D:3 * D]

        # TODO(synk): for Npad >= 512 (high-res inputs) switch to flash-style KV
        # tiling instead of materializing the full (Npad, Npad) f32 score matrix.
        # TODO(synk): if the bundle dump shows relayouts from the 64-lane head-column
        # slices at odd offsets, reorder qkv_w columns at init to 128-lane-align them.
        for hh in range(num_heads):                                 # static unroll
            c0 = hh * hd
            qh = q_im[:, c0:c0 + hd]
            kh = k_im[:, c0:c0 + hd]
            vh = v_im[:, c0:c0 + hd]

            # scores without materializing kh.T: contract the hd axes directly
            s = jax.lax.dot_general(
                qh, kh, (((1,), (1,)), ((), ())),
                preferred_element_type=jnp.float32)                 # (Npad, Npad) f32
            if kmask is not None:
                s = s + kmask
            s = s - jnp.max(s, axis=-1, keepdims=True)
            e = jnp.exp(s)
            p = e * pl.reciprocal(jnp.sum(e, axis=-1, keepdims=True), approx=True)

            oh = jnp.dot(p.astype(bf16), vh,
                         preferred_element_type=jnp.float32)        # (Npad, hd) f32
            heads_ref[:, c0:c0 + hd] = oh.astype(bf16)              # concat in VMEM

        # head concat + output projection as ONE K=D MXU matmul
        attn_tb = jnp.dot(heads_ref[...], pw,
                          preferred_element_type=jnp.float32)       # (Npad, D) f32
        # fused proj bias + residual (drop_path is identity in eval mode)
        act_ref[pl.ds(r0, Npad), :] = (
            act_ref[pl.ds(r0, Npad), :] + attn_tb + projb_ref[0])

    # ---- MLP branch: x + fc2(GELU(fc1(LN2(x)))), on the flattened row block -------
    # TODO(synk): for ViT-L on v7x, tile fc1/fc2 along the hidden dim so only a
    # (D, t_hidden) slab is VMEM-resident per step.
    x = act_ref[...]
    h2 = _layernorm(x, ln2w_ref[0], ln2b_ref[0])
    h2 = jnp.dot(h2.astype(bf16), fc1w_ref[0],
                 preferred_element_type=jnp.float32) + fc1b_ref[0]
    h2 = _gelu(h2)
    h2 = jnp.dot(h2.astype(bf16), fc2w_ref[0],
                 preferred_element_type=jnp.float32) + fc2b_ref[0]
    act_ref[...] = x + h2

    # fused final LayerNorm + the only HBM store of the activations (bf16)
    @pl.when(layer == depth - 1)
    def _finalize():
        y = _layernorm(act_ref[...], normw_ref[...], normb_ref[...])
        for tb in range(TB):
            o_ref[tb] = y[tb * Npad:(tb + 1) * Npad, :].astype(o_ref.dtype)


# ---------------------------------------------------------------------------
# parameter init (deterministic, synthetic).  Matmul weights are stored bf16,
# pre-transposed to (in, out); LayerNorm params and biases stay f32.  Per-layer
# weights are stacked along a leading `depth` axis so one pallas_call can
# pipeline them over the depth grid axis.  The 1/sqrt(hd) softmax scale is
# folded into the Q columns of qkv_w (valid because qkv_bias=False).
# ---------------------------------------------------------------------------
def init_params(key, *, img_size, patch_size, in_chans, embed_dim, depth,
                num_heads, mlp_ratio, nattr):
    D = embed_dim
    hidden = int(D * mlp_ratio)
    num_patches = (img_size // patch_size) ** 2
    keys = jax.random.split(key, 8)
    bf16 = jnp.bfloat16

    def tn(k, shape, dtype=jnp.float32, std=0.02):
        return (std * jax.random.truncated_normal(k, -2.0, 2.0, shape)).astype(dtype)

    scale = float(D // num_heads) ** (-0.5)
    qkv_w = tn(keys[3], (depth, D, 3 * D), jnp.float32)
    qkv_w = qkv_w.at[:, :, :D].multiply(scale)      # fold softmax scale into Wq

    return {
        "patch_w": tn(keys[0], (in_chans * patch_size * patch_size, D), bf16),
        "patch_b": jnp.zeros((1, D), jnp.float32),
        "cls_token": tn(keys[1], (1, nattr, D)),
        "pos_embed": tn(keys[2], (1, num_patches + nattr, D)),
        "norm_w": jnp.ones((1, D), jnp.float32),
        "norm_b": jnp.zeros((1, D), jnp.float32),
        "ln1_w": jnp.ones((depth, 1, D), jnp.float32),
        "ln1_b": jnp.zeros((depth, 1, D), jnp.float32),
        "qkv_w": qkv_w.astype(bf16),                               # qkv_bias=False
        "proj_w": tn(keys[4], (depth, D, D), bf16),
        "proj_b": jnp.zeros((depth, 1, D), jnp.float32),
        "ln2_w": jnp.ones((depth, 1, D), jnp.float32),
        "ln2_b": jnp.zeros((depth, 1, D), jnp.float32),
        "fc1_w": tn(keys[5], (depth, D, hidden), bf16),
        "fc1_b": jnp.zeros((depth, 1, hidden), jnp.float32),
        "fc2_w": tn(keys[6], (depth, hidden, D), bf16),
        "fc2_b": jnp.zeros((depth, 1, D), jnp.float32),
    }


# ---------------------------------------------------------------------------
# forward wrapper
# ---------------------------------------------------------------------------
def vit_forward(x, params, *, patch_size, num_heads, nattr, batch_block=None):
    B, C, H, W = x.shape
    p = patch_size
    Hp, Wp = H // p, W // p
    Np = Hp * Wp
    D = params["pos_embed"].shape[-1]
    depth = params["qkv_w"].shape[0]
    bf16 = jnp.bfloat16

    # --- patch extraction (glue): NCHW -> (B*Np, C*p*p), patch-vector order
    #     (c, ki, kj) matching Conv2d(kernel=stride=p) weight flattening.
    patches = (
        x.reshape(B, C, Hp, p, Wp, p)
        .transpose(0, 2, 4, 1, 3, 5)
        .reshape(B * Np, C * p * p)
    ).astype(bf16)

    rows = B * Np
    K = C * p * p
    tm = min(512, _round_up(rows, 8))               # mem-bound: big lane-dense tiles
    rows_pad = _round_up(rows, tm)
    if rows_pad != rows:
        patches = jnp.pad(patches, ((0, rows_pad - rows), (0, 0)))

    tokens = pl.pallas_call(
        patch_embed_kernel,
        out_shape=jax.ShapeDtypeStruct((rows_pad, D), bf16),
        grid=(rows_pad // tm,),
        in_specs=[
            pl.BlockSpec((tm, K), lambda i: (i, 0)),      # patch rows, tiled
            pl.BlockSpec((K, D), lambda i: (0, 0)),       # projection weight, resident
            pl.BlockSpec((1, D), lambda i: (0, 0)),       # bias
        ],
        out_specs=pl.BlockSpec((tm, D), lambda i: (i, 0)),
        compiler_params=pltpu.CompilerParams(dimension_semantics=("parallel",)),
    )(patches, params["patch_w"], params["patch_b"])[:rows].reshape(B, Np, D)

    # --- cls/pos prefix (host-side, tiny): rows [0,nattr)=cls+pos, [nattr,N)=pos, rest 0
    N = Np + nattr
    Npad = _round_up(N, SEQ_ALIGN)
    prefix_valid = jnp.concatenate(
        [params["cls_token"][0] + params["pos_embed"][0, :nattr],
         params["pos_embed"][0, nattr:]], axis=0).astype(jnp.float32)     # (N, D)
    prefix = jnp.pad(prefix_valid, ((0, Npad - N), (0, 0)))               # (Npad, D)

    # --- batch blocking: TB images share each depth step's weight DMA
    if batch_block is None:
        for cand in (4, 2, 1):
            if B % cand == 0:
                batch_block = cand
                break
    TB = batch_block
    assert B % TB == 0, (B, TB)

    tok_spec = pl.BlockSpec((TB, Np, D), lambda b, l: (b, 0, 0))
    out_spec = pl.BlockSpec((TB, Npad, D), lambda b, l: (b, 0, 0))

    def lspec(arr):          # per-layer stacked weight: pick layer l each depth step
        return pl.BlockSpec((1,) + arr.shape[1:], lambda b, l: (l, 0, 0))

    def cspec(arr):          # constant 2-D params (prefix, final norm)
        return pl.BlockSpec(arr.shape, lambda b, l: (0, 0))

    # --- entire transformer stack + final LayerNorm in one fused pallas_call
    out = pl.pallas_call(
        functools.partial(vit_blocks_kernel,
                          num_heads=num_heads, nattr=nattr, n_valid=N),
        out_shape=jax.ShapeDtypeStruct((B, Npad, D), bf16),
        grid=(B // TB, depth),
        in_specs=[
            tok_spec, cspec(prefix),
            lspec(params["ln1_w"]), lspec(params["ln1_b"]),
            lspec(params["qkv_w"]),
            lspec(params["proj_w"]), lspec(params["proj_b"]),
            lspec(params["ln2_w"]), lspec(params["ln2_b"]),
            lspec(params["fc1_w"]), lspec(params["fc1_b"]),
            lspec(params["fc2_w"]), lspec(params["fc2_b"]),
            cspec(params["norm_w"]), cspec(params["norm_b"]),
        ],
        out_specs=out_spec,
        scratch_shapes=[
            pltpu.VMEM((TB * Npad, D), jnp.float32),   # resident activations
            pltpu.VMEM((Npad, D), bf16),               # per-image head-concat buffer
        ],
        compiler_params=pltpu.CompilerParams(
            dimension_semantics=("parallel", "arbitrary"),
            vmem_limit_bytes=_vmem_limit_bytes(),
        ),
    )(
        tokens, prefix,
        params["ln1_w"], params["ln1_b"],
        params["qkv_w"],
        params["proj_w"], params["proj_b"],
        params["ln2_w"], params["ln2_b"],
        params["fc1_w"], params["fc1_b"],
        params["fc2_w"], params["fc2_b"],
        params["norm_w"], params["norm_b"],
    )

    # return x[:, nattr:]  (drop the cls/attr tokens and seq padding), as in PyTorch
    return out[:, nattr:N]


# ---------------------------------------------------------------------------
if __name__ == "__main__":
    # small config consistent with VisionTransformer(__init__) shapes
    cfg = dict(
        img_size=16, patch_size=4, in_chans=3,
        embed_dim=32, depth=2, num_heads=4, mlp_ratio=4.0, nattr=1,
    )
    B = 2

    key = jax.random.PRNGKey(0)
    kx, kp = jax.random.split(key)
    x = jax.random.normal(kx, (B, cfg["in_chans"], cfg["img_size"], cfg["img_size"]),
                          dtype=jnp.float32)
    params = init_params(
        kp,
        img_size=cfg["img_size"], patch_size=cfg["patch_size"],
        in_chans=cfg["in_chans"], embed_dim=cfg["embed_dim"],
        depth=cfg["depth"], num_heads=cfg["num_heads"],
        mlp_ratio=cfg["mlp_ratio"], nattr=cfg["nattr"],
    )

    out = vit_forward(
        x, params,
        patch_size=cfg["patch_size"], num_heads=cfg["num_heads"], nattr=cfg["nattr"],
    )
    out = jax.block_until_ready(out)

    num_patches = (cfg["img_size"] // cfg["patch_size"]) ** 2
    assert out.shape == (B, num_patches, cfg["embed_dim"]), out.shape
    assert bool(jnp.all(jnp.isfinite(out.astype(jnp.float32))))
    print("KERNEL_OK")
</pallas_src>

<mosaic_0001>
module attributes {stable_mosaic.version = 11 : i64} {
  func.func @patch_embed_kernel(%arg0: i32, %arg1: memref<32x48xbf16, #tpu.memory_space<vmem>>, %arg2: memref<48x32xbf16, #tpu.memory_space<vmem>>, %arg3: memref<1x32xf32, #tpu.memory_space<vmem>>, %arg4: memref<32x32xbf16, #tpu.memory_space<vmem>>) attributes {dimension_semantics = [#tpu.dimension_semantics<parallel>], iteration_bounds = array<i64: 1>, scalar_prefetch = 0 : i64, scratch_operands = 0 : i64, tpu.core_type = #tpu.core_type<tc>, window_params = [{transform_indices = @transform_0, window_bounds = array<i64: 32, 48>}, {pipeline_mode = #tpu.pipeline_mode<synchronous>, transform_indices = @transform_1, window_bounds = array<i64: 48, 32>}, {pipeline_mode = #tpu.pipeline_mode<synchronous>, transform_indices = @transform_2, window_bounds = array<i64: 1, 32>}, {transform_indices = @transform_3, window_bounds = array<i64: 32, 32>}]} {
    %c0 = arith.constant 0 : index
    %c0_0 = arith.constant 0 : index
    %0 = vector.load %arg1[%c0, %c0_0] : memref<32x48xbf16, #tpu.memory_space<vmem>>, vector<32x48xbf16>
    %c0_1 = arith.constant 0 : index
    %c0_2 = arith.constant 0 : index
    %1 = vector.load %arg2[%c0_1, %c0_2] : memref<48x32xbf16, #tpu.memory_space<vmem>>, vector<48x32xbf16>
    %cst = arith.constant dense<0.000000e+00> : vector<32x32xf32>
    %2 = tpu.matmul %0, %1, %cst {dimension_numbers = #tpu.dot_dimension_numbers<[1], [0], [0], [1], [0, 0, 1, 1], [], []>} : vector<32x48xbf16>, vector<48x32xbf16>, vector<32x32xf32> -> vector<32x32xf32>
    %c0_3 = arith.constant 0 : index
    %c0_4 = arith.constant 0 : index
    %3 = vector.load %arg3[%c0_3, %c0_4] : memref<1x32xf32, #tpu.memory_space<vmem>>, vector<1x32xf32>
    %4 = vector.broadcast %3 : vector<1x32xf32> to vector<32x32xf32>
    %5 = arith.addf %2, %4 : vector<32x32xf32>
    %6 = arith.truncf %5 : vector<32x32xf32> to vector<32x32xbf16>
    %c0_5 = arith.constant 0 : index
    %c0_6 = arith.constant 0 : index
    %7 = vector.load %arg4[%c0_5, %c0_6] : memref<32x32xbf16, #tpu.memory_space<vmem>>, vector<32x32xbf16>
    tpu.vector_store %arg4[%c0_5, %c0_6], %6 {strides = array<i32>} : memref<32x32xbf16, #tpu.memory_space<vmem>>, vector<32x32xbf16>,
    return
  }
  func.func @transform_0(%arg0: i32) -> (i32, i32) {
    %c0_i32 = arith.constant 0 : i32
    %c0_i32_0 = arith.constant 0 : i32
    return %arg0, %c0_i32 : i32, i32
  }
  func.func @transform_1(%arg0: i32) -> (i32, i32) {
    %c0_i32 = arith.constant 0 : i32
    %c0_i32_0 = arith.constant 0 : i32
    %c0_i32_1 = arith.constant 0 : i32
    return %c0_i32, %c0_i32_0 : i32, i32
  }
  func.func @transform_2(%arg0: i32) -> (i32, i32) {
    %c0_i32 = arith.constant 0 : i32
    %c0_i32_0 = arith.constant 0 : i32
    %c0_i32_1 = arith.constant 0 : i32
    return %c0_i32, %c0_i32_0 : i32, i32
  }
  func.func @transform_3(%arg0: i32) -> (i32, i32) {
    %c0_i32 = arith.constant 0 : i32
    %c0_i32_0 = arith.constant 0 : i32
    return %arg0, %c0_i32 : i32, i32
  }
}

</mosaic_0001>

<llo_original>
// kernel: tpu_custom_call.1
$region0: #{tpu_custom_call.1}
  #allocation0 [shape = 'u32[]', space=smem, size = 0x4, offset = 0x4, fixed_abs, tag = 'smem constant byte address 0x4 - core index']
  #allocation1 [shape = 'u32[144,128]{1,0:T(1,128)}', space=vmem, size = 0x12000, scoped, tag = 'internal scratch']
  %s0 = inlined_call_operand.vmem [shape: bf16[32,48], index: 0, kind: input, shape index: {}]
  %s1 = inlined_call_operand.vmem [shape: bf16[48,32], index: 1, kind: input, shape index: {}]
  %s2 = inlined_call_operand.vmem [shape: f32[1,32], index: 2, kind: input, shape index: {}]
  %s3 = inlined_call_operand.hbm [shape: bf16[32,32], index: 3, kind: output, shape index: {}]
  %s4 = sld [smem:[#allocation0]]
  $region22: #{tpu_custom_call.1} parent=0
    _
  %s6 = ssub.s32 1, %s4
  %s7 = scalar_select 0, %s6, %s4
  $region1: #{tpu_custom_call.1} parent=0
    #allocation2 [shape = 'u8[8192]{0}', space=vmem, size = 0x2000, scoped, tag = 'output window, operand 0, single buffered']
    #allocation3 [shape = 's32[1]{0}', space=sflag, size = 0x4, scoped, tag = 'scoped memory for tpu_custom_call.1']
    %8 = vsyncpa [#allocation3], 0
    // Predicated region
    $region2: #{tpu_custom_call.1} parent=1 // pred_check
      _
    $region3: #{tpu_custom_call.1} parent=1 // pred_check_branch
      %10 = sbr.rel (0) target = $region5
    $region4: #{tpu_custom_call.1} parent=1 // pred_region
      _
    $region5: #{tpu_custom_call.1} parent=1 // pred_fallthru
      _
    // Predicated region
    $region6: #{tpu_custom_call.1} parent=1 // pred_check
      _
    $region7: #{tpu_custom_call.1} parent=1 // pred_check_branch
      %12 = sbr.rel (0) target = $region9
    $region8: #{tpu_custom_call.1} parent=1 // pred_region
      _
    $region9: #{tpu_custom_call.1} parent=1 // pred_fallthru
      _
    // Predicated region
    $region10: #{tpu_custom_call.1} parent=1 // pred_check
      _
    $region11: #{tpu_custom_call.1} parent=1 // pred_check_branch
      %14 = sbr.rel (0) target = $region13
    $region12: #{tpu_custom_call.1} parent=1 // pred_region
      _
    $region13: #{tpu_custom_call.1} parent=1 // pred_fallthru
      _
    %v16 = vld [vmem:[%s0] sm:$0xf]
    %v17 = vld [vmem:[%s0 + $0x4] sm:$0xf]
    %v18 = vld [vmem:[%s0 + $0x8] sm:$0xf]
    %v19 = vld [vmem:[%s0 + $0xc] sm:$0xf]
    %v20 = vld [vmem:[%s1] sm:$0xf]
    %v21 = vld [vmem:[%s1 + $0x4] sm:$0xf]
    %v22 = vld [vmem:[%s1 + $0x8] sm:$0xf]
    %v23 = vld [vmem:[%s1 + $0xc] sm:$0xf]
    %v24 = vld [vmem:[%s1 + $0x10] sm:$0xf]
    %v25 = vld [vmem:[%s1 + $0x14] sm:$0xf]
    %v26 = vld [vmem:[%s2] sm:$0x1]
    %v28 = vlaneseq
    %v29 = vshrl.u32 %v28, 7
    %v30 = vsub.s32 0, %v29
    %v31 = vrot.slane %v26, %v30
    %v37 = vunpack.c.l.b16 %v16
    %v38 = vunpack.c.l.b16 %v17
    %v39 = vunpack.c.l.b16 %v18
    %v40 = vunpack.c.l.b16 %v19
    %v41 = vpack.c.b16 %v38, %v37
    %v42 = vpack.c.b16 %v40, %v39
    %v49 = vunpack.c.l.b16 %v20
    %v50 = vunpack.c.l.b16 %v21
    %v51 = vunpack.c.l.b16 %v22
    %v52 = vunpack.c.l.b16 %v23
    %v53 = vunpack.c.l.b16 %v24
    %v54 = vunpack.c.l.b16 %v25
    %v55 = vpack.c.b16 %v50, %v49
    %v56 = vpack.c.b16 %v52, %v51
    %v57 = vpack.c.b16 %v54, %v53
    %vm61 = vcmask 392192
    %v63 = vsel %vm61, %v41, 0
    %v66 = vsel %vm61, %v42, 0
    %68 = vmatprep.subr.bf16.mxu0 0
    %69 = vmatpush1.bf16.msra.mxu0 0
    %70 = vmatprep.subr.bf16.mxu0 0
    %71 = vmatpush1.bf16.msra.mxu0 0
    %72 = vmatprep.subr.bf16.mxu0 0
    %73 = vmatpush1.bf16.msra.mxu0 0
    %74 = vmatprep.subr.bf16.mxu0 0
    %75 = vmatpush1.bf16.msra.mxu0 0
    %76 = vmatprep.subr.bf16.mxu0 0
    %77 = vmatpush1.bf16.msra.mxu0 0
    %78 = vmatprep.subr.bf16.mxu0 0
    %79 = vmatpush1.bf16.msra.mxu0 %v57
    %80 = vmatprep.subr.bf16.mxu0 0
    %81 = vmatpush1.bf16.msra.mxu0 %v56
    %82 = vmatprep.subr.bf16.mxu0 0
    %83 = vmatpush1.bf16.msra.mxu0 %v55
    %84 = vmatprep.subr.bf16.mxu0 0
    %85 = vmatpush2.bf16.msra.mxu0 0
    %86 = vmatprep.subr.bf16.mxu0 0
    %87 = vmatpush2.bf16.msra.mxu0 0
    %88 = vmatprep.subr.bf16.mxu0 0
    %89 = vmatpush2.bf16.msra.mxu0 0
    %90 = vmatprep.subr.bf16.mxu0 0
    %91 = vmatpush2.bf16.msra.mxu0 0
    %92 = vmatprep.subr.bf16.mxu0 0
    %93 = vmatpush2.bf16.msra.mxu0 0
    %94 = vmatprep.subr.bf16.mxu0 0
    %95 = vmatpush2.bf16.msra.mxu0 0
    %96 = vmatprep.subr.bf16.mxu0 0
    %97 = vmatpush2.bf16.msra.mxu0 0
    %98 = vmatprep.subr.bf16.mxu0 0
    %99 = vmatpush2.bf16.msra.mxu0 0
    %100 = vmatprep.mubr.bf16.mxu0 0
    %101 = vmatmul.mubr.bf16.gmra.mxu0 %v63
    %v102 = vpop.f32.mrf.mxu0
    %v103 = vadd.f32 %v31, %v102
    %v104 = vpop.f32.mrf.mxu0
    %v105 = vpop.f32.mrf.mxu0
    %v106 = vadd.f32 %v31, %v105
    %v107 = vpop.f32.mrf.mxu0
    %108 = vmatprep.mubr.bf16.mxu0 0
    %109 = vmatmul.mubr.bf16.gmra.mxu0 %v66
    %v110 = vpop.f32.mrf.mxu0
    %v111 = vadd.f32 %v31, %v110
    %v112 = vpop.f32.mrf.mxu0
    %v113 = vpop.f32.mrf.mxu0
    %v114 = vadd.f32 %v31, %v113
    %v115 = vpop.f32.mrf.mxu0
    %116 = vdwg.mxu0
    %v117 = vpack.c.bf16 %v106, %v103
    %v118 = vpack.c.bf16 %v114, %v111
    %v121 = vunpack.c.l.b16 %v117
    %v122 = vunpack.c.h.b16 %v117
    %v123 = vunpack.c.l.b16 %v118
    %v124 = vunpack.c.h.b16 %v118
    %v125 = vpack.c.b16 %v121, %v121
    %v126 = vpack.c.b16 %v122, %v122
    %v127 = vpack.c.b16 %v123, %v123
    %v128 = vpack.c.b16 %v124, %v124
    %vm133 = vcmask 257024
    %134 = vst.msk [vmem:[#allocation2] sm:$0xf] %vm133, %v125
    %135 = vst.msk [vmem:[#allocation2 + $0x4] sm:$0xf] %vm133, %v126
    %136 = vst.msk [vmem:[#allocation2 + $0x8] sm:$0xf] %vm133, %v127
    %137 = vst.msk [vmem:[#allocation2 + $0xc] sm:$0xf] %vm133, %v128
    // Predicated region
    $region14: #{tpu_custom_call.1} parent=1 // pred_check
      _
    $region15: #{tpu_custom_call.1} parent=1 // pred_check_branch
      %139 = sbr.rel (0) target = $region17
    $region16: #{tpu_custom_call.1} parent=1 // pred_region
      %s141 = ssub.s32 256, 256
      %142 = vsyncadd [#allocation3], %s141
      %s143 = sshll.u32 [#allocation2], 4
      %s144 = int_to_ptr.vmem [resolvable:$true] %s143
      %149 = dma.vmem_to_hbm [thread:$0]  %s144, 256, %s3, [#allocation3], 64, 64, 4
    $region17: #{tpu_custom_call.1} parent=1 // pred_fallthru
      _
    // Predicated region
    $region18: #{tpu_custom_call.1} parent=1 // pred_check
      _
    $region19: #{tpu_custom_call.1} parent=1 // pred_check_branch
      %151 = sbr.rel (0) target = $region21
    $region20: #{tpu_custom_call.1} parent=1 // pred_region
      %152 = dma.done [#allocation3], 256
    $region21: #{tpu_custom_call.1} parent=1 // pred_fallthru
      _
    %153 = vsyncpa [#allocation3], 1

</llo_original>
